<compile_context>
chip_gen: v6e
topology: v6e:2x2x1
jax: 0.10.0
libtpu: 0.0.40
codegen_flags: <defaults>
</compile_context>

<pallas_src>
import jax
import jax.numpy as jnp
from jax.experimental import pallas as pl
from jax.experimental.pallas import tpu as pltpu


def _bilinear_attention_kernel(x1_ref, x2_ref, w_ref, w1t_ref, b1_ref,
                               w2r_ref, out_ref, bx_ref):
    # x1_ref : (TB, D1)     batch tile of input_1
    # x2_ref : (TB, S, D2)  batch tile of input_2
    # w_ref  : (D1, D2)     bilinear weights
    # w1t_ref: (D2, P)      pre_pooling_linear weight, transposed
    # b1_ref : (1, P)       pre_pooling_linear bias
    # w2r_ref: (1, P)       pooling_linear weight as a row (its bias cancels in softmax)
    # out_ref: (TB, D2)
    # bx_ref : (TB, S, D2)  VMEM scratch for b_x (read twice)
    TB, S, D2 = bx_ref.shape
    P = w1t_ref.shape[1]

    # bilinear: tanh( (x1 @ W)[:, None, :] * x2 )
    xw = jnp.dot(x1_ref[...], w_ref[...],
                 preferred_element_type=jnp.float32)              # (TB, D2)
    bx_ref[...] = jnp.tanh(xw[:, None, :] * x2_ref[...])          # (TB, S, D2)

    # pre-pooling linear over all TB*S rows in a single 2-D MXU matmul
    bx2d = bx_ref[...].reshape(TB * S, D2)                        # leading-dim flatten
    pre2d = jnp.tanh(jnp.dot(bx2d, w1t_ref[...],
                             preferred_element_type=jnp.float32)
                     + b1_ref[...])                               # (TB*S, P)
    pre = pre2d.reshape(TB, S, P)                                 # (TB, S, P)

    # pooling projection: VPU multiply + cross-lane reduce (bias b2 cancels in softmax)
    logits = jnp.sum(pre * w2r_ref[...][None], axis=-1)           # (TB, S), S on lanes

    # softmax over the sequence axis (lane axis)
    m = jnp.max(logits, axis=-1, keepdims=True)                   # (TB, 1)
    e = jnp.exp(logits - m)                                       # (TB, S)
    inv = pl.reciprocal(jnp.sum(e, axis=-1, keepdims=True), approx=True)
    att = e * inv                                                 # (TB, S)

    # attention-weighted sum over S (sublane reduction)
    out_ref[...] = jnp.sum(bx_ref[...] * att[:, :, None], axis=1)  # (TB, D2)


def bilinear_attention_v2(input_1, input_2, w_bilinear, w1, b1, w2, b2,
                          *, block_b=None, vmem_limit_bytes=None):
    """input_1: (B, D1), input_2: (B, S, D2).  Weights in PyTorch convention:
    w1: (P, D2) [Linear(D2->P).weight], b1: (P,), w2: (1, P), b2: (1,).
    b2 is accepted for interface parity but cancels inside the softmax."""
    B, D1 = input_1.shape
    _, S, D2 = input_2.shape
    P = w1.shape[0]

    # --- batch tile selection (TB rows per grid step) -----------------------
    if block_b is None:
        block_b = min(B, 128)
    block_b = max(1, min(block_b, B))
    if block_b < B and block_b % 8 != 0:
        block_b = ((block_b + 7) // 8) * 8        # sublane alignment when tiling

    n_blocks = pl.cdiv(B, block_b)
    Bp = n_blocks * block_b

    x1 = input_1.astype(jnp.float32)
    x2 = input_2.astype(jnp.float32)
    # TODO(synk): for HBM-bound shapes on v6e/v7x, ship input_2 as bfloat16 and
    # upcast in-kernel (halves the dominant DMA stream); kept f32 here to match
    # the f32 reference check exactly.
    if Bp != B:
        x1 = jnp.pad(x1, ((0, Bp - B), (0, 0)))
        x2 = jnp.pad(x2, ((0, Bp - B), (0, 0), (0, 0)))

    w1t = jnp.transpose(w1).astype(jnp.float32)   # (D2, P)
    b1r = b1.reshape(1, P).astype(jnp.float32)    # (1, P)
    w2r = w2.reshape(1, P).astype(jnp.float32)    # (1, P); b2 dropped (cancels)

    out = pl.pallas_call(
        _bilinear_attention_kernel,
        out_shape=jax.ShapeDtypeStruct((Bp, D2), jnp.float32),
        grid_spec=pltpu.PrefetchScalarGridSpec(
            num_scalar_prefetch=0,
            grid=(n_blocks,),
            in_specs=[
                pl.BlockSpec((block_b, D1), lambda b: (b, 0)),
                pl.BlockSpec((block_b, S, D2), lambda b: (b, 0, 0)),
                pl.BlockSpec((D1, D2), lambda b: (0, 0)),
                pl.BlockSpec((D2, P), lambda b: (0, 0)),
                pl.BlockSpec((1, P), lambda b: (0, 0)),
                pl.BlockSpec((1, P), lambda b: (0, 0)),
            ],
            out_specs=pl.BlockSpec((block_b, D2), lambda b: (b, 0)),
            scratch_shapes=[pltpu.VMEM((block_b, S, D2), jnp.float32)],
        ),
        compiler_params=pltpu.CompilerParams(
            dimension_semantics=("parallel",),
            vmem_limit_bytes=vmem_limit_bytes),
    )(x1, x2, w_bilinear.astype(jnp.float32), w1t, b1r, w2r)

    return out[:B] if Bp != B else out


def _reference(input_1, input_2, w_bilinear, w1, b1, w2, b2):
    x = jnp.matmul(input_1, w_bilinear)[:, None, :]               # (B, 1, D2)
    b_x = jnp.tanh(x * input_2)                                   # (B, S, D2)
    pre = jnp.tanh(jnp.einsum("bsd,pd->bsp", b_x, w1) + b1)       # (B, S, P)
    logits = jnp.einsum("bsp,op->bso", pre, w2)[..., 0] + b2[0]   # (B, S)
    att = jax.nn.softmax(logits, axis=-1)                         # (B, S)
    return jnp.sum(b_x * att[..., None], axis=1)                  # (B, D2)


if __name__ == "__main__":
    # Small shapes consistent with the module's forward:
    B, S = 2, 8          # batch, sequence length
    D1, D2 = 16, 32      # input1_dim, input2_dim
    P = 16               # config.pre_pooling_dim

    key = jax.random.PRNGKey(0)
    k1, k2, kw, kw1, kb1, kw2, kb2 = jax.random.split(key, 7)

    input_1 = jax.random.normal(k1, (B, D1), dtype=jnp.float32)
    input_2 = jax.random.normal(k2, (B, S, D2), dtype=jnp.float32)

    # Deterministic parameter init (matching shapes / init ranges of __init__):
    w_bilinear = jax.random.uniform(kw, (D1, D2), minval=-0.25, maxval=0.25,
                                    dtype=jnp.float32)
    lim1 = 1.0 / (D2 ** 0.5)
    w1 = jax.random.uniform(kw1, (P, D2), minval=-lim1, maxval=lim1,
                            dtype=jnp.float32)   # pre_pooling_linear.weight
    b1 = jax.random.uniform(kb1, (P,), minval=-lim1, maxval=lim1,
                            dtype=jnp.float32)   # pre_pooling_linear.bias
    lim2 = 1.0 / (P ** 0.5)
    w2 = jax.random.uniform(kw2, (1, P), minval=-lim2, maxval=lim2,
                            dtype=jnp.float32)   # pooling_linear.weight
    b2 = jax.random.uniform(kb2, (1,), minval=-lim2, maxval=lim2,
                            dtype=jnp.float32)   # pooling_linear.bias

    out = bilinear_attention_v2(input_1, input_2, w_bilinear, w1, b1, w2, b2)
    out = jax.block_until_ready(out)

    ref = _reference(input_1, input_2, w_bilinear, w1, b1, w2, b2)
    assert out.shape == (B, D2)
    # approx=True reciprocal in the softmax denominator -> allow ~1e-3 slack
    assert jnp.allclose(out, ref, atol=1e-3, rtol=1e-3), "mismatch vs reference"

    print("KERNEL_OK")
</pallas_src>

<mosaic_0001>
module attributes {stable_mosaic.version = 11 : i64} {
  func.func @_bilinear_attention_kernel(%arg0: i32, %arg1: memref<2x16xf32, #tpu.memory_space<vmem>>, %arg2: memref<2x8x32xf32, #tpu.memory_space<vmem>>, %arg3: memref<16x32xf32, #tpu.memory_space<vmem>>, %arg4: memref<32x16xf32, #tpu.memory_space<vmem>>, %arg5: memref<1x16xf32, #tpu.memory_space<vmem>>, %arg6: memref<1x16xf32, #tpu.memory_space<vmem>>, %arg7: memref<2x32xf32, #tpu.memory_space<vmem>>, %arg8: memref<2x8x32xf32, #tpu.memory_space<vmem>>) attributes {dimension_semantics = [#tpu.dimension_semantics<parallel>], iteration_bounds = array<i64: 1>, scalar_prefetch = 0 : i64, scratch_operands = 1 : i64, tpu.core_type = #tpu.core_type<tc>, window_params = [{transform_indices = @transform_0, window_bounds = array<i64: 2, 16>}, {transform_indices = @transform_1, window_bounds = array<i64: 2, 8, 32>}, {pipeline_mode = #tpu.pipeline_mode<synchronous>, transform_indices = @transform_2, window_bounds = array<i64: 16, 32>}, {pipeline_mode = #tpu.pipeline_mode<synchronous>, transform_indices = @transform_3, window_bounds = array<i64: 32, 16>}, {pipeline_mode = #tpu.pipeline_mode<synchronous>, transform_indices = @transform_4, window_bounds = array<i64: 1, 16>}, {pipeline_mode = #tpu.pipeline_mode<synchronous>, transform_indices = @transform_5, window_bounds = array<i64: 1, 16>}, {transform_indices = @transform_6, window_bounds = array<i64: 2, 32>}]} {
    %c0 = arith.constant 0 : index
    %c0_0 = arith.constant 0 : index
    %0 = vector.load %arg1[%c0, %c0_0] : memref<2x16xf32, #tpu.memory_space<vmem>>, vector<2x16xf32>
    %c0_1 = arith.constant 0 : index
    %c0_2 = arith.constant 0 : index
    %1 = vector.load %arg3[%c0_1, %c0_2] : memref<16x32xf32, #tpu.memory_space<vmem>>, vector<16x32xf32>
    %cst = arith.constant dense<0.000000e+00> : vector<2x32xf32>
    %2 = tpu.matmul %0, %1, %cst {dimension_numbers = #tpu.dot_dimension_numbers<[1], [0], [0], [1], [0, 0, 1, 1], [], []>} : vector<2x16xf32>, vector<16x32xf32>, vector<2x32xf32> -> vector<2x32xf32>
    %3 = vector.shape_cast %2 : vector<2x32xf32> to vector<2x1x32xf32>
    %c0_3 = arith.constant 0 : index
    %c0_4 = arith.constant 0 : index
    %c0_5 = arith.constant 0 : index
    %4 = vector.load %arg2[%c0_3, %c0_4, %c0_5] : memref<2x8x32xf32, #tpu.memory_space<vmem>>, vector<2x8x32xf32>
    %5 = vector.broadcast %3 : vector<2x1x32xf32> to vector<2x8x32xf32>
    %6 = arith.mulf %5, %4 : vector<2x8x32xf32>
    %7 = math.tanh %6 : vector<2x8x32xf32>
    %c0_6 = arith.constant 0 : index
    %c0_7 = arith.constant 0 : index
    %c0_8 = arith.constant 0 : index
    %8 = vector.load %arg8[%c0_6, %c0_7, %c0_8] : memref<2x8x32xf32, #tpu.memory_space<vmem>>, vector<2x8x32xf32>
    tpu.vector_store %arg8[%c0_6, %c0_7, %c0_8], %7 {strides = array<i32>} : memref<2x8x32xf32, #tpu.memory_space<vmem>>, vector<2x8x32xf32>,
    %c0_9 = arith.constant 0 : index
    %c0_10 = arith.constant 0 : index
    %c0_11 = arith.constant 0 : index
    %9 = vector.load %arg8[%c0_9, %c0_10, %c0_11] : memref<2x8x32xf32, #tpu.memory_space<vmem>>, vector<2x8x32xf32>
    %10 = vector.shape_cast %9 : vector<2x8x32xf32> to vector<16x32xf32>
    %c0_12 = arith.constant 0 : index
    %c0_13 = arith.constant 0 : index
    %11 = vector.load %arg4[%c0_12, %c0_13] : memref<32x16xf32, #tpu.memory_space<vmem>>, vector<32x16xf32>
    %cst_14 = arith.constant dense<0.000000e+00> : vector<16x16xf32>
    %12 = tpu.matmul %10, %11, %cst_14 {dimension_numbers = #tpu.dot_dimension_numbers<[1], [0], [0], [1], [0, 0, 1, 1], [], []>} : vector<16x32xf32>, vector<32x16xf32>, vector<16x16xf32> -> vector<16x16xf32>
    %c0_15 = arith.constant 0 : index
    %c0_16 = arith.constant 0 : index
    %13 = vector.load %arg5[%c0_15, %c0_16] : memref<1x16xf32, #tpu.memory_space<vmem>>, vector<1x16xf32>
    %14 = vector.broadcast %13 : vector<1x16xf32> to vector<16x16xf32>
    %15 = arith.addf %12, %14 : vector<16x16xf32>
    %16 = math.tanh %15 : vector<16x16xf32>
    %17 = vector.shape_cast %16 : vector<16x16xf32> to vector<2x8x16xf32>
    %c0_17 = arith.constant 0 : index
    %c0_18 = arith.constant 0 : index
    %18 = vector.load %arg6[%c0_17, %c0_18] : memref<1x16xf32, #tpu.memory_space<vmem>>, vector<1x16xf32>
    %19 = vector.shape_cast %18 : vector<1x16xf32> to vector<1x1x16xf32>
    %20 = vector.broadcast %19 : vector<1x1x16xf32> to vector<2x8x16xf32>
    %21 = arith.mulf %17, %20 : vector<2x8x16xf32>
    %cst_19 = arith.constant dense<0.000000e+00> : vector<2x8xf32>
    %22 = vector.multi_reduction <add>, %21, %cst_19 [2] : vector<2x8x16xf32> to vector<2x8xf32>
    %cst_20 = arith.constant dense<0xFF800000> : vector<2xf32>
    %23 = vector.multi_reduction <maximumf>, %22, %cst_20 [1] : vector<2x8xf32> to vector<2xf32>
    %24 = vector.shape_cast %23 : vector<2xf32> to vector<2x1xf32>
    %25 = vector.broadcast %24 : vector<2x1xf32> to vector<2x8xf32>
    %26 = arith.subf %22, %25 : vector<2x8xf32>
    %27 = math.exp %26 : vector<2x8xf32>
    %cst_21 = arith.constant dense<0.000000e+00> : vector<2xf32>
    %28 = vector.multi_reduction <add>, %27, %cst_21 [1] : vector<2x8xf32> to vector<2xf32>
    %29 = vector.shape_cast %28 : vector<2xf32> to vector<2x1xf32>
    %30 = tpu.reciprocal %29 {approx = true} : vector<2x1xf32> -> vector<2x1xf32>
    %31 = vector.broadcast %30 : vector<2x1xf32> to vector<2x8xf32>
    %32 = arith.mulf %27, %31 : vector<2x8xf32>
    %c0_22 = arith.constant 0 : index
    %c0_23 = arith.constant 0 : index
    %c0_24 = arith.constant 0 : index
    %33 = vector.load %arg8[%c0_22, %c0_23, %c0_24] : memref<2x8x32xf32, #tpu.memory_space<vmem>>, vector<2x8x32xf32>
    %34 = vector.shape_cast %32 : vector<2x8xf32> to vector<2x8x1xf32>
    %35 = vector.broadcast %34 : vector<2x8x1xf32> to vector<2x8x32xf32>
    %36 = arith.mulf %33, %35 : vector<2x8x32xf32>
    %cst_25 = arith.constant dense<0.000000e+00> : vector<2x32xf32>
    %37 = vector.multi_reduction <add>, %36, %cst_25 [1] : vector<2x8x32xf32> to vector<2x32xf32>
    %c0_26 = arith.constant 0 : index
    %c0_27 = arith.constant 0 : index
    %38 = vector.load %arg7[%c0_26, %c0_27] : memref<2x32xf32, #tpu.memory_space<vmem>>, vector<2x32xf32>
    tpu.vector_store %arg7[%c0_26, %c0_27], %37 {strides = array<i32>} : memref<2x32xf32, #tpu.memory_space<vmem>>, vector<2x32xf32>,
    return
  }
  func.func @transform_0(%arg0: i32) -> (i32, i32) {
    %c0_i32 = arith.constant 0 : i32
    %c0_i32_0 = arith.constant 0 : i32
    return %arg0, %c0_i32 : i32, i32
  }
  func.func @transform_1(%arg0: i32) -> (i32, i32, i32) {
    %c0_i32 = arith.constant 0 : i32
    %c0_i32_0 = arith.constant 0 : i32
    %c0_i32_1 = arith.constant 0 : i32
    return %arg0, %c0_i32, %c0_i32_0 : i32, i32, i32
  }
  func.func @transform_2(%arg0: i32) -> (i32, i32) {
    %c0_i32 = arith.constant 0 : i32
    %c0_i32_0 = arith.constant 0 : i32
    %c0_i32_1 = arith.constant 0 : i32
    return %c0_i32, %c0_i32_0 : i32, i32
  }
  func.func @transform_3(%arg0: i32) -> (i32, i32) {
    %c0_i32 = arith.constant 0 : i32
    %c0_i32_0 = arith.constant 0 : i32
    %c0_i32_1 = arith.constant 0 : i32
    return %c0_i32, %c0_i32_0 : i32, i32
  }
  func.func @transform_4(%arg0: i32) -> (i32, i32) {
    %c0_i32 = arith.constant 0 : i32
    %c0_i32_0 = arith.constant 0 : i32
    %c0_i32_1 = arith.constant 0 : i32
    return %c0_i32, %c0_i32_0 : i32, i32
  }
  func.func @transform_5(%arg0: i32) -> (i32, i32) {
    %c0_i32 = arith.constant 0 : i32
    %c0_i32_0 = arith.constant 0 : i32
    %c0_i32_1 = arith.constant 0 : i32
    return %c0_i32, %c0_i32_0 : i32, i32
  }
  func.func @transform_6(%arg0: i32) -> (i32, i32) {
    %c0_i32 = arith.constant 0 : i32
    %c0_i32_0 = arith.constant 0 : i32
    return %arg0, %c0_i32 : i32, i32
  }
}

</mosaic_0001>

<llo_original>
// kernel: tpu_custom_call.1
$region0: #{tpu_custom_call.1}
  #allocation0 [shape = 'u32[]', space=smem, size = 0x4, offset = 0x4, fixed_abs, tag = 'smem constant byte address 0x4 - core index']
  #allocation1 [shape = 'u32[144,128]{1,0:T(1,128)}', space=vmem, size = 0x12000, scoped, tag = 'internal scratch']
  #allocation2 [shape = 'f32[2,8,32]{2,1,0:T(8,128)}', space=vmem, size = 0x2000, scoped, tag = 'scratch operand']
  %s0 = inlined_call_operand.vmem [shape: f32[2,16], index: 0, kind: input, shape index: {}]
  %s1 = inlined_call_operand.vmem [shape: f32[2,8,32], index: 1, kind: input, shape index: {}]
  %s2 = inlined_call_operand.vmem [shape: f32[16,32], index: 2, kind: input, shape index: {}]
  %s3 = inlined_call_operand.vmem [shape: f32[32,16], index: 3, kind: input, shape index: {}]
  %s4 = inlined_call_operand.vmem [shape: f32[1,16], index: 4, kind: input, shape index: {}]
  %s5 = inlined_call_operand.vmem [shape: f32[1,16], index: 5, kind: input, shape index: {}]
  %s6 = inlined_call_operand.hbm [shape: f32[2,32], index: 6, kind: output, shape index: {}]
  %s7 = sld [smem:[#allocation0]]
  $region34: #{tpu_custom_call.1} parent=0
    _
  %s9 = ssub.s32 1, %s7
  %s10 = scalar_select 0, %s9, %s7
  $region1: #{tpu_custom_call.1} parent=0
    #allocation3 [shape = 'u8[1024]{0}', space=vmem, size = 0x400, scoped, tag = 'output window, operand 0, single buffered']
    #allocation4 [shape = 's32[1]{0}', space=sflag, size = 0x4, scoped, tag = 'scoped memory for tpu_custom_call.1']
    %11 = vsyncpa [#allocation4], 0
    // Predicated region
    $region2: #{tpu_custom_call.1} parent=1 // pred_check
      _
    $region3: #{tpu_custom_call.1} parent=1 // pred_check_branch
      %13 = sbr.rel (0) target = $region5
    $region4: #{tpu_custom_call.1} parent=1 // pred_region
      _
    $region5: #{tpu_custom_call.1} parent=1 // pred_fallthru
      _
    // Predicated region
    $region6: #{tpu_custom_call.1} parent=1 // pred_check
      _
    $region7: #{tpu_custom_call.1} parent=1 // pred_check_branch
      %15 = sbr.rel (0) target = $region9
    $region8: #{tpu_custom_call.1} parent=1 // pred_region
      _
    $region9: #{tpu_custom_call.1} parent=1 // pred_fallthru
      _
    // Predicated region
    $region10: #{tpu_custom_call.1} parent=1 // pred_check
      _
    $region11: #{tpu_custom_call.1} parent=1 // pred_check_branch
      %17 = sbr.rel (0) target = $region13
    $region12: #{tpu_custom_call.1} parent=1 // pred_region
      _
    $region13: #{tpu_custom_call.1} parent=1 // pred_fallthru
      _
    // Predicated region
    $region14: #{tpu_custom_call.1} parent=1 // pred_check
      _
    $region15: #{tpu_custom_call.1} parent=1 // pred_check_branch
      %19 = sbr.rel (0) target = $region17
    $region16: #{tpu_custom_call.1} parent=1 // pred_region
      _
    $region17: #{tpu_custom_call.1} parent=1 // pred_fallthru
      _
    // Predicated region
    $region18: #{tpu_custom_call.1} parent=1 // pred_check
      _
    $region19: #{tpu_custom_call.1} parent=1 // pred_check_branch
      %21 = sbr.rel (0) target = $region21
    $region20: #{tpu_custom_call.1} parent=1 // pred_region
      _
    $region21: #{tpu_custom_call.1} parent=1 // pred_fallthru
      _
    // Predicated region
    $region22: #{tpu_custom_call.1} parent=1 // pred_check
      _
    $region23: #{tpu_custom_call.1} parent=1 // pred_check_branch
      %23 = sbr.rel (0) target = $region25
    $region24: #{tpu_custom_call.1} parent=1 // pred_region
      _
    $region25: #{tpu_custom_call.1} parent=1 // pred_fallthru
      _
    %v24 = vld [vmem:[%s0] sm:$0x3]
    %v25 = vld [vmem:[%s2] sm:$0xff]
    %v26 = vld [vmem:[%s2 + $0x8] sm:$0xff]
    %vm27 = vcmask 130048
    %v29 = vsel %vm27, %v24, 0
    %31 = vmatprep.subr.mxu0 0.0
    %32 = vmatpush1.msra.mxu0 0.0
    %33 = vmatprep.subr.mxu0 0.0
    %34 = vmatpush1.msra.mxu0 0.0
    %35 = vmatprep.subr.mxu0 0.0
    %36 = vmatpush1.msra.mxu0 0.0
    %37 = vmatprep.subr.mxu0 0.0
    %38 = vmatpush1.msra.mxu0 0.0
    %39 = vmatprep.subr.mxu0 0.0
    %40 = vmatpush1.msra.mxu0 0.0
    %41 = vmatprep.subr.mxu0 0.0
    %42 = vmatpush1.msra.mxu0 0.0
    %43 = vmatprep.subr.mxu0 0.0
    %44 = vmatpush1.msra.mxu0 0.0
    %45 = vmatprep.subr.mxu0 0.0
    %46 = vmatpush1.msra.mxu0 0.0
    %47 = vmatprep.subr.mxu0 0.0
    %48 = vmatpush1.msra.mxu0 0.0
    %49 = vmatprep.subr.mxu0 0.0
    %50 = vmatpush1.msra.mxu0 0.0
    %51 = vmatprep.subr.mxu0 0.0
    %52 = vmatpush1.msra.mxu0 0.0
    %53 = vmatprep.subr.mxu0 0.0
    %54 = vmatpush1.msra.mxu0 0.0
    %55 = vmatprep.subr.mxu0 0.0
    %56 = vmatpush1.msra.mxu0 0.0
    %57 = vmatprep.subr.mxu0 0.0
    %58 = vmatpush1.msra.mxu0 0.0
    %59 = vmatprep.subr.mxu0 0.0
    %60 = vmatpush1.msra.mxu0 %v26
    %61 = vmatprep.subr.mxu0 0.0
    %62 = vmatpush1.msra.mxu0 %v25
    %63 = vmatprep.subr.mxu0 0.0
    %64 = vmatpush2.msra.mxu0 0.0
    %65 = vmatprep.subr.mxu0 0.0
    %66 = vmatpush2.msra.mxu0 0.0
    %67 = vmatprep.subr.mxu0 0.0
    %68 = vmatpush2.msra.mxu0 0.0
    %69 = vmatprep.subr.mxu0 0.0
    %70 = vmatpush2.msra.mxu0 0.0
    %71 = vmatprep.subr.mxu0 0.0
    %72 = vmatpush2.msra.mxu0 0.0
    %73 = vmatprep.subr.mxu0 0.0
    %74 = vmatpush2.msra.mxu0 0.0
    %75 = vmatprep.subr.mxu0 0.0
    %76 = vmatpush2.msra.mxu0 0.0
    %77 = vmatprep.subr.mxu0 0.0
    %78 = vmatpush2.msra.mxu0 0.0
    %79 = vmatprep.subr.mxu0 0.0
    %80 = vmatpush2.msra.mxu0 0.0
    %81 = vmatprep.subr.mxu0 0.0
    %82 = vmatpush2.msra.mxu0 0.0
    %83 = vmatprep.subr.mxu0 0.0
    %84 = vmatpush2.msra.mxu0 0.0
    %85 = vmatprep.subr.mxu0 0.0
    %86 = vmatpush2.msra.mxu0 0.0
    %87 = vmatprep.subr.mxu0 0.0
    %88 = vmatpush2.msra.mxu0 0.0
    %89 = vmatprep.subr.mxu0 0.0
    %90 = vmatpush2.msra.mxu0 0.0
    %91 = vmatprep.subr.mxu0 0.0
    %92 = vmatpush2.msra.mxu0 0.0
    %93 = vmatprep.subr.mxu0 0.0
    %94 = vmatpush2.msra.mxu0 0.0
    %95 = vmatprep.mubr.f32.mxu0 0.0
    %96 = vmatmul.mubr.f32.gmra.mxu0 %v29
    %v97 = vpop.f32.mrf.mxu0
    %v98 = vadd.f32 0.0, %v97
    %v99 = vpop.f32.mrf.mxu0
    %100 = vdwg.mxu0
    %v103 = vunpack.c.l.s4 1966171168
    %v104 = vunpack.c.0.s8 %v103
    %v105 = vlaneseq
    %v106 = vshrl.u32 %v105, 7
    %v107 = vsub.s32 %v104, %v106
    %v108 = vrot.slane %v98, %v107
    %v109 = vcombine.high %v108, %v108
    %v111 = vunpack.c.l.s4 1966171168
    %v112 = vunpack.c.0.s8 %v111
    %v113 = vlaneseq
    %v114 = vshrl.u32 %v113, 7
    %v115 = vsub.s32 %v112, %v114
    %v116 = vrot.slane %v108, %v115
    %v118 = vunpack.c.l.s4 1966171168
    %v119 = vunpack.c.0.s8 %v118
    %v120 = vlaneseq
    %v121 = vshrl.u32 %v120, 7
    %v122 = vsub.s32 %v119, %v121
    %v123 = vrot.slane %v109, %v122
    %v124 = vld [vmem:[%s1] sm:$0xff]
    %v125 = vld [vmem:[%s1 + $0x8] sm:$0xff]
    %v126 = vlaneseq
    %v127 = vshrl.u32 %v126, 7
    %v128 = vsub.s32 0, %v127
    %v129 = vrot.slane %v116, %v128
    %v130 = vlaneseq
    %v131 = vshrl.u32 %v130, 7
    %v132 = vsub.s32 0, %v131
    %v133 = vrot.slane %v123, %v132
    %v136 = vmul.f32 %v129, %v124
    %v137 = vmul.f32 %v133, %v125
    %v138 = vtanh.pop %v136
    %v139 = vtanh.pop %v137
    %vm140 = vcmask 261120
    %141 = vst.msk [vmem:[#allocation2] sm:$0xff] %vm140, %v138
    %142 = vst.msk [vmem:[#allocation2 + $0x8] sm:$0xff] %vm140, %v139
    %v143 = vld [vmem:[#allocation2] sm:$0xff]
    %v144 = vld [vmem:[#allocation2 + $0x8] sm:$0xff]
    %v145 = vld [vmem:[%s3] sm:$0xff]
    %v146 = vld [vmem:[%s3 + $0x8] sm:$0xff]
    %v147 = vld [vmem:[%s3 + $0x10] sm:$0xff]
    %v148 = vld [vmem:[%s3 + $0x18] sm:$0xff]
    %v149 = vld [vmem:[%s4] sm:$0x1]
    %v151 = vlaneseq
    %v152 = vshrl.u32 %v151, 7
    %v153 = vsub.s32 0, %v152
    %v154 = vrot.slane %v149, %v153
    %v157 = vsel %vm140, %v143, 0
    %v160 = vsel %vm140, %v144, 0
    %162 = vmatprep.subr.mxu0 0.0
    %163 = vmatpush1.msra.mxu0 0.0
    %164 = vmatprep.subr.mxu0 0.0
    %165 = vmatpush1.msra.mxu0 0.0
    %166 = vmatprep.subr.mxu0 0.0
    %167 = vmatpush1.msra.mxu0 0.0
    %168 = vmatprep.subr.mxu0 0.0
    %169 = vmatpush1.msra.mxu0 0.0
    %170 = vmatprep.subr.mxu0 0.0
    %171 = vmatpush1.msra.mxu0 0.0
    %172 = vmatprep.subr.mxu0 0.0
    %173 = vmatpush1.msra.mxu0 0.0
    %174 = vmatprep.subr.mxu0 0.0
    %175 = vmatpush1.msra.mxu0 0.0
    %176 = vmatprep.subr.mxu0 0.0
    %177 = vmatpush1.msra.mxu0 0.0
    %178 = vmatprep.subr.mxu0 0.0
    %179 = vmatpush1.msra.mxu0 0.0
    %180 = vmatprep.subr.mxu0 0.0
    %181 = vmatpush1.msra.mxu0 0.0
    %182 = vmatprep.subr.mxu0 0.0
    %183 = vmatpush1.msra.mxu0 0.0
    %184 = vmatprep.subr.mxu0 0.0
    %185 = vmatpush1.msra.mxu0 0.0
    %186 = vmatprep.subr.mxu0 0.0
    %187 = vmatpush1.msra.mxu0 %v148
    %188 = vmatprep.subr.mxu0 0.0
    %189 = vmatpush1.msra.mxu0 %v147
    %190 = vmatprep.subr.mxu0 0.0
    %191 = vmatpush1.msra.mxu0 %v146
    %192 = vmatprep.subr.mxu0 0.0
    %193 = vmatpush1.msra.mxu0 %v145
    %194 = vmatprep.subr.mxu0 0.0
    %195 = vmatpush2.msra.mxu0 0.0
    %196 = vmatprep.subr.mxu0 0.0
    %197 = vmatpush2.msra.mxu0 0.0
    %198 = vmatprep.subr.mxu0 0.0
    %199 = vmatpush2.msra.mxu0 0.0
    %200 = vmatprep.subr.mxu0 0.0
    %201 = vmatpush2.msra.mxu0 0.0
    %202 = vmatprep.subr.mxu0 0.0
    %203 = vmatpush2.msra.mxu0 0.0
    %204 = vmatprep.subr.mxu0 0.0
    %205 = vmatpush2.msra.mxu0 0.0
    %206 = vmatprep.subr.mxu0 0.0
    %207 = vmatpush2.msra.mxu0 0.0
    %208 = vmatprep.subr.mxu0 0.0
    %209 = vmatpush2.msra.mxu0 0.0
    %210 = vmatprep.subr.mxu0 0.0
    %211 = vmatpush2.msra.mxu0 0.0
    %212 = vmatprep.subr.mxu0 0.0
    %213 = vmatpush2.msra.mxu0 0.0
    %214 = vmatprep.subr.mxu0 0.0
    %215 = vmatpush2.msra.mxu0 0.0
    %216 = vmatprep.subr.mxu0 0.0
    %217 = vmatpush2.msra.mxu0 0.0
    %218 = vmatprep.subr.mxu0 0.0
    %219 = vmatpush2.msra.mxu0 0.0
    %220 = vmatprep.subr.mxu0 0.0
    %221 = vmatpush2.msra.mxu0 0.0
    %222 = vmatprep.subr.mxu0 0.0
    %223 = vmatpush2.msra.mxu0 0.0
    %224 = vmatprep.subr.mxu0 0.0
    %225 = vmatpush2.msra.mxu0 0.0
    %226 = vmatprep.mubr.f32.mxu0 0.0
    %227 = vmatmul.mubr.f32.gmra.mxu0 %v157
    %v228 = vpop.f32.mrf.mxu0
    %v229 = vadd.f32 %v154, %v228
    %v230 = vpop.f32.mrf.mxu0
    %231 = vmatprep.mubr.f32.mxu0 0.0
    %232 = vmatmul.mubr.f32.gmra.mxu0 %v160
    %v233 = vpop.f32.mrf.mxu0
    %v234 = vadd.f32 %v154, %v233
    %v235 = vpop.f32.mrf.mxu0
    %236 = vdwg.mxu0
    %v237 = vtanh.pop %v229
    %v238 = vtanh.pop %v234
    %v239 = vld [vmem:[%s5] sm:$0x1]
    %v241 = vlaneseq
    %v242 = vshrl.u32 %v241, 7
    %v243 = vsub.s32 0, %v242
    %v244 = vrot.slane %v239, %v243
    %v246 = vmul.f32 %v237, %v244
    %v247 = vmul.f32 %v238, %v244
    %v248 = vsel %vm27, %v246, 0.0
    %249 = vadd.xlane.f32.xlu0 %v248
    %v250 = vpop.xlane.xlu0 %249
    %v251 = vsel %vm27, %v247, 0.0
    %252 = vadd.xlane.f32.xlu0 %v251
    %v253 = vpop.xlane.xlu0 %252
    %v256 = vlaneseq
    %v257 = vand.u32 %v256, 127
    %v258 = vlaneseq
    %v259 = vshrl.u32 %v258, 7
    %v260 = vsub.s32 %v257, %v259
    %v261 = vrot.slane %v250, %v260
    %v262 = vlaneseq
    %v263 = vshrl.u32 %v262, 7
    %v264 = vsub.s32 %v257, %v263
    %v265 = vrot.slane %v253, %v264
    %vm266 = vcmask 1041409
    %v267 = vsel %vm266, %v265, %v261
    %vm269 = vcmask 58368
    %v270 = vsel %vm269, %v267, -inf
    %271 = vmax.xlane.f32.xlu0 %v270
    %v272 = vpop.xlane.xlu0 %271
    %v274 = vlaneseq
    %v275 = vshrl.u32 %v274, 7
    %v276 = vsub.s32 0, %v275
    %v277 = vrot.slane %v272, %v276
    %v278 = vlaneseq
    %v279 = vshrl.u32 %v278, 7
    %v280 = vsub.s32 1, %v279
    %v281 = vrot.slane %v272, %v280
    %v284 = vsub.f32 %v250, %v277
    %v285 = vsub.f32 %v253, %v281
    %v286 = vmul.f32 %v284, 1.442695
    %v287 = vpow.pop %v286
    %v288 = vmul.f32 %v285, 1.442695
    %v289 = vpow.pop %v288
    %292 = vset.pattern.permute.xlu0 0
    %293 = vperm.xlu0 %292, %v287
    %v294 = vpop.permute.xlu0 %293
    %295 = vset.pattern.permute.xlu0 0
    %296 = vperm.xlu0 %295, %v289
    %v297 = vpop.permute.xlu0 %296
    %v298 = vlaneseq
    %v299 = vshrl.u32 %v298, 7
    %v300 = vsub.s32 %v257, %v299
    %v301 = vrot.slane %v294, %v300
    %v302 = vlaneseq
    %v303 = vshrl.u32 %v302, 7
    %v304 = vsub.s32 %v257, %v303
    %v305 = vrot.slane %v297, %v304
    %v306 = vsel %vm266, %v305, %v301
    %v308 = vsel %vm269, %v306, 0.0
    %309 = vadd.xlane.f32.xlu0 %v308
    %v310 = vpop.xlane.xlu0 %309
    %v311 = vrcp.pop %v310
    %v313 = vlaneseq
    %v314 = vshrl.u32 %v313, 7
    %v315 = vsub.s32 0, %v314
    %v316 = vrot.slane %v311, %v315
    %v317 = vlaneseq
    %v318 = vshrl.u32 %v317, 7
    %v319 = vsub.s32 1, %v318
    %v320 = vrot.slane %v311, %v319
    %v323 = vmul.f32 %v287, %v316
    %v324 = vmul.f32 %v289, %v320
    %326 = vset.pattern.permute.xlu0 0
    %327 = vperm.xlu0 %326, %v323
    %v328 = vpop.permute.xlu0 %327
    %331 = vset.pattern.permute.xlu0 0
    %332 = vperm.xlu0 %331, %v324
    %v333 = vpop.permute.xlu0 %332
    %v335 = vmul.f32 %v143, %v328
    %v336 = vmul.f32 %v144, %v333
    %v337 = vsel %vm140, %v335, 0.0
    %v338 = vrot.slane %v337, 4
    %v339 = vadd.f32 %v337, %v338
    %v340 = vrot.slane %v339, 2
    %v341 = vadd.f32 %v339, %v340
    %v342 = vrot.slane %v341, 1
    %v343 = vadd.f32 %v341, %v342
    %v344 = vsel %vm140, %v336, 0.0
    %v345 = vrot.slane %v344, 4
    %v346 = vadd.f32 %v344, %v345
    %v347 = vrot.slane %v346, 2
    %v348 = vadd.f32 %v346, %v347
    %v349 = vrot.slane %v348, 1
    %v350 = vadd.f32 %v348, %v349
    %v353 = vsel %vm266, %v350, %v343
    %vm355 = vcmask 254976
    %356 = vst.msk [vmem:[#allocation3] sm:$0x3] %vm355, %v353
    // Predicated region
    $region26: #{tpu_custom_call.1} parent=1 // pred_check
      _
    $region27: #{tpu_custom_call.1} parent=1 // pred_check_branch
      %358 = sbr.rel (0) target = $region29
    $region28: #{tpu_custom_call.1} parent=1 // pred_region
      %s360 = ssub.s32 32, 32
      %361 = vsyncadd [#allocation4], %s360
      %s363 = sshll.u32 [#allocation3], 4
      %s364 = int_to_ptr.vmem [resolvable:$true] %s363
      %366 = dma.vmem_to_hbm [thread:$0]  %s364, 32, %s6, [#allocation4]
    $region29: #{tpu_custom_call.1} parent=1 // pred_fallthru
      _
    // Predicated region
    $region30: #{tpu_custom_call.1} parent=1 // pred_check
      _
    $region31: #{tpu_custom_call.1} parent=1 // pred_check_branch
      %368 = sbr.rel (0) target = $region33
    $region32: #{tpu_custom_call.1} parent=1 // pred_region
      %369 = dma.done [#allocation4], 32
    $region33: #{tpu_custom_call.1} parent=1 // pred_fallthru
      _
    %370 = vsyncpa [#allocation4], 1

</llo_original>
